<compile_context>
chip_gen: v6e
topology: v6e:2x2x1
jax: 0.10.0
libtpu: 0.0.40
codegen_flags: <defaults>
</compile_context>

<pallas_src>
import functools

import jax
import jax.numpy as jnp
from jax import lax
from jax.experimental import pallas as pl
from jax.experimental.pallas import tpu as pltpu


# --------------------------------------------------------------------------------------
# Kernel
# --------------------------------------------------------------------------------------
def basic_block_kernel(x_ref, d1_ref, d2_ref, w1_ref, w2_ref, b1_ref, b2_ref, o_ref):
    # x_ref  : (1, C, tL)   input tile (doubles as the residual)
    # d1_ref : (1, 1, P, 2) conv1 boundary-column corrections (f32, precomputed)
    # d2_ref : (1, 1, P, 2) conv2 boundary-column corrections (f32, precomputed)
    # w1_ref : (3, P, C)    conv1 weights, tap-major, BN1 scale folded in (compute dtype)
    # w2_ref : (3, P, P)    conv2 weights, tap-major, BN2 scale folded in
    # b1_ref : (P, 1)       folded BN1 bias (f32)
    # b2_ref : (P, 1)       folded BN2 bias (f32)
    # o_ref  : (1, P, tL)
    tL = x_ref.shape[2]
    cdt = w1_ref.dtype                                   # matmul compute dtype

    x32 = x_ref[0].astype(jnp.float32)                   # residual in f32
    xc = x_ref[0].astype(cdt)

    # one-hot (1, tL) rows selecting the first / last column of the tile
    lane = lax.broadcasted_iota(jnp.int32, (1, tL), 1)
    first = (lane == 0).astype(jnp.float32)
    last = (lane == tL - 1).astype(jnp.float32)

    def conv3(w_ref, v, d_ref, b_ref):
        # 3-tap conv as tap-wise accumulating MXU matmuls on wrapped (rolled) inputs,
        # plus a precomputed 2-column correction that restores the true halo / padding.
        v_l = pltpu.roll(v, 1, axis=1)                    # v_l[:, i] = v[:, i-1] (wrap)
        v_r = pltpu.roll(v, tL - 1, axis=1)               # v_r[:, i] = v[:, i+1] (wrap)
        acc = jnp.dot(w_ref[0], v_l, preferred_element_type=jnp.float32)
        acc = acc + jnp.dot(w_ref[1], v, preferred_element_type=jnp.float32)
        acc = acc + jnp.dot(w_ref[2], v_r, preferred_element_type=jnp.float32)
        d = d_ref[0, 0]                                   # (P, 2) f32
        return acc + b_ref[...] + d[:, 0:1] * first + d[:, 1:2] * last

    h = jnp.maximum(conv3(w1_ref, xc, d1_ref, b1_ref), 0.0)       # conv1+bn1+relu
    o = conv3(w2_ref, h.astype(cdt), d2_ref, b2_ref)              # conv2+bn2
    o_ref[...] = jnp.maximum(o + x32, 0.0)[None].astype(o_ref.dtype)


# --------------------------------------------------------------------------------------
# Wrapper-side helpers
# --------------------------------------------------------------------------------------
def fold_bn(gamma, beta, mean, var, eps):
    scale = gamma / jnp.sqrt(var + eps)
    bias = beta - mean * scale
    return scale, bias


def _pack_conv_taps(w, scale, dtype):
    # torch Conv1d weight (Cout, Cin, 3) -> (3, Cout, Cin), folded BN scale applied
    # (conv has no bias).  Tap 0 reads x[t-1], tap 1 reads x[t], tap 2 reads x[t+1].
    wf = w.astype(jnp.float32) * scale[:, None, None]
    return jnp.transpose(wf, (2, 0, 1)).astype(dtype)


def _take_cols(x, idx):
    # x: (N, C, L); idx: (M,) global column indices (may be out of range -> zeros)
    L = x.shape[2]
    valid = ((idx >= 0) & (idx < L)).astype(x.dtype)
    cols = jnp.take(x, jnp.clip(idx, 0, L - 1), axis=2)
    return cols * valid[None, None, :]


def _boundary_deltas(x, w1p, w2p, b1, tl, nt, cdt):
    """Per-tile (P, 2) corrections for the wrapped-roll boundary columns of both convs.

    Tile j spans [b_j, b_{j+1}) with b_k = k*tl.  In the kernel the +-1 taps use a
    circular roll within the tile, so column 0 / tL-1 see the tile's own far column
    instead of the true neighbour (or zero padding at sequence ends).  The correction
    delta = W_tap @ (true_column - wrapped_column) is added post-matmul, pre-ReLU.
    """
    N, C, L = x.shape
    hp = lax.Precision.HIGHEST
    bpos = jnp.arange(nt + 1, dtype=jnp.int32) * tl       # tile boundaries (nt+1,)

    x_m1 = _take_cols(x, bpos - 1)                        # x[b-1]   (N, C, nt+1)
    x_0 = _take_cols(x, bpos)                             # x[b]     (N, C, nt+1)

    def conv1_cols(pos):
        # h = relu(bn1(conv1(x)))[:, :, pos]; zero where pos is outside [0, L)
        xm1 = _take_cols(x, pos - 1).astype(cdt)
        xc0 = _take_cols(x, pos).astype(cdt)
        xp1 = _take_cols(x, pos + 1).astype(cdt)
        pre = (jnp.einsum('oc,ncm->nom', w1p[0], xm1,
                          preferred_element_type=jnp.float32, precision=hp)
               + jnp.einsum('oc,ncm->nom', w1p[1], xc0,
                            preferred_element_type=jnp.float32, precision=hp)
               + jnp.einsum('oc,ncm->nom', w1p[2], xp1,
                            preferred_element_type=jnp.float32, precision=hp)
               + b1[None, :, :])
        h = jnp.maximum(pre, 0.0)
        valid = ((pos >= 0) & (pos < L)).astype(h.dtype)
        return h * valid[None, None, :]

    h_m1 = conv1_cols(bpos - 1)                           # h[b-1]   (N, P, nt+1)
    h_0 = conv1_cols(bpos)                                # h[b]     (N, P, nt+1)

    def deltas(w_taps, m1, z0):
        # left (col 0):   W_tap0 @ (pad(b_j - 1)   - v(b_{j+1} - 1))
        # right (col -1): W_tap2 @ (pad(b_{j+1})   - v(b_j))
        dl = jnp.einsum('oc,ncj->njo', w_taps[0],
                        (m1[:, :, :nt] - m1[:, :, 1:]).astype(cdt),
                        preferred_element_type=jnp.float32, precision=hp)
        dr = jnp.einsum('oc,ncj->njo', w_taps[2],
                        (z0[:, :, 1:] - z0[:, :, :nt]).astype(cdt),
                        preferred_element_type=jnp.float32, precision=hp)
        return jnp.stack([dl, dr], axis=-1)               # (N, nt, P, 2) f32

    return deltas(w1p, x_m1, x_0), deltas(w2p, h_m1, h_0)


def _per_step_vmem_bytes(C, P, tl, xbytes, wbytes):
    io = 2 * (C + P) * tl * xbytes                        # double-buffered x / out blocks
    wts = 2 * 3 * P * (C + P) * wbytes + 8 * P * 4        # weights + biases (x2 buffers)
    tmp = (4 * C + 7 * P) * tl * 4                        # rolled copies, h, accumulators
    return io + wts + tmp


def _choose_tile_l(L, C, P, N, xbytes, wbytes, budget_bytes=24 * 1024 * 1024):
    if L % 128 != 0:
        # TODO(synk): pad/mask ragged sequence lengths instead of one full-length tile.
        return L
    divisors = [tl for tl in range(128, L + 1, 128) if L % tl == 0]
    fitting = [tl for tl in divisors
               if _per_step_vmem_bytes(C, P, tl, xbytes, wbytes) <= budget_bytes]
    tl = max(fitting) if fitting else 128
    if N == 1 and tl == L and len(divisors) > 1:
        tl = max(d for d in divisors if d < L)            # >=2 tiles for 2-TC chips
    return tl


# --------------------------------------------------------------------------------------
# Public entry point
# --------------------------------------------------------------------------------------
@functools.partial(jax.jit, static_argnames=("compute_dtype", "tile_l"))
def basic_block_pallas(x, w1, w2, g1, be1, m1, v1, g2, be2, m2, v2,
                       *, eps=1e-5, compute_dtype=jnp.float32, tile_l=None):
    """Fused BasicBlock forward (eval-mode BN, stride=1, no downsample).

    For bandwidth-bound shapes pass x in bf16 (output follows x.dtype) and
    compute_dtype=jnp.bfloat16; accumulation / bias / residual stay in f32.
    """
    N, C, L = x.shape
    P = w1.shape[0]
    if C != P:
        raise ValueError("downsample=None path requires inplanes == planes")
    # TODO(synk): stride>1 / downsample and training-mode BatchNorm not implemented.

    s1, b1 = fold_bn(g1, be1, m1, v1, eps)
    s2, b2 = fold_bn(g2, be2, m2, v2, eps)
    w1p = _pack_conv_taps(w1, s1, compute_dtype)          # (3, P, C)
    w2p = _pack_conv_taps(w2, s2, compute_dtype)          # (3, P, P)
    b1c = b1.astype(jnp.float32)[:, None]                 # (P, 1)
    b2c = b2.astype(jnp.float32)[:, None]

    xbytes = jnp.dtype(x.dtype).itemsize
    wbytes = jnp.dtype(compute_dtype).itemsize
    tl = _choose_tile_l(L, C, P, N, xbytes, wbytes) if tile_l is None else int(tile_l)
    if tl != L and (L % tl != 0 or tl % 128 != 0):
        raise ValueError("tile_l must divide L and be a multiple of 128")
    nt = L // tl

    d1, d2 = _boundary_deltas(x, w1p, w2p, b1c, tl, nt, compute_dtype)

    vmem_need = _per_step_vmem_bytes(C, P, tl, xbytes, wbytes)
    vmem_limit = int(min(max(2 * vmem_need + (1 << 20), 16 << 20), 32 << 20))

    return pl.pallas_call(
        basic_block_kernel,
        out_shape=jax.ShapeDtypeStruct((N, P, L), x.dtype),
        grid=(N, nt),
        in_specs=[
            pl.BlockSpec((1, C, tl), lambda n, j: (n, 0, j)),        # x (also residual)
            pl.BlockSpec((1, 1, P, 2), lambda n, j: (n, j, 0, 0)),    # conv1 corrections
            pl.BlockSpec((1, 1, P, 2), lambda n, j: (n, j, 0, 0)),    # conv2 corrections
            pl.BlockSpec((3, P, C), lambda n, j: (0, 0, 0)),          # conv1 taps
            pl.BlockSpec((3, P, P), lambda n, j: (0, 0, 0)),          # conv2 taps
            pl.BlockSpec((P, 1), lambda n, j: (0, 0)),                # bn1 bias
            pl.BlockSpec((P, 1), lambda n, j: (0, 0)),                # bn2 bias
        ],
        out_specs=pl.BlockSpec((1, P, tl), lambda n, j: (n, 0, j)),
        compiler_params=pltpu.CompilerParams(
            dimension_semantics=("parallel", "parallel"),
            vmem_limit_bytes=vmem_limit),
    )(x, d1, d2, w1p, w2p, b1c, b2c)


# --------------------------------------------------------------------------------------
# Reference (pure JAX) and self-test
# --------------------------------------------------------------------------------------
def reference_basic_block(x, w1, w2, g1, be1, m1, v1, g2, be2, m2, v2, eps=1e-5):
    dn = ("NCW", "OIW", "NCW")

    def conv(z, w):
        return lax.conv_general_dilated(z, w, window_strides=(1,), padding=((1, 1),),
                                        dimension_numbers=dn,
                                        precision=lax.Precision.HIGHEST)

    def bn(z, g, b, m, v):
        return (z - m[None, :, None]) / jnp.sqrt(v[None, :, None] + eps) \
               * g[None, :, None] + b[None, :, None]

    h = jnp.maximum(bn(conv(x, w1), g1, be1, m1, v1), 0.0)
    o = bn(conv(h, w2), g2, be2, m2, v2)
    return jnp.maximum(o + x, 0.0)


if __name__ == "__main__":
    key = jax.random.PRNGKey(0)
    ks = jax.random.split(key, 11)

    N, C, L = 2, 8, 256          # inplanes == planes == 8 (downsample=None path)
    P = C

    x = jax.random.normal(ks[0], (N, C, L), jnp.float32)
    w1 = jax.random.normal(ks[1], (P, C, 3), jnp.float32) * 0.2
    w2 = jax.random.normal(ks[2], (P, P, 3), jnp.float32) * 0.2

    g1 = 1.0 + 0.1 * jax.random.normal(ks[3], (P,), jnp.float32)
    be1 = 0.1 * jax.random.normal(ks[4], (P,), jnp.float32)
    m1 = 0.1 * jax.random.normal(ks[5], (P,), jnp.float32)
    v1 = 1.0 + 0.1 * jax.random.uniform(ks[6], (P,), jnp.float32)

    g2 = 1.0 + 0.1 * jax.random.normal(ks[7], (P,), jnp.float32)
    be2 = 0.1 * jax.random.normal(ks[8], (P,), jnp.float32)
    m2 = 0.1 * jax.random.normal(ks[9], (P,), jnp.float32)
    v2 = 1.0 + 0.1 * jax.random.uniform(ks[10], (P,), jnp.float32)

    ref = reference_basic_block(x, w1, w2, g1, be1, m1, v1, g2, be2, m2, v2)

    # f32, auto tile choice (single L tile for this shape)
    out = jax.block_until_ready(
        basic_block_pallas(x, w1, w2, g1, be1, m1, v1, g2, be2, m2, v2))
    if not jnp.allclose(out, ref, atol=2e-2, rtol=2e-2):
        raise AssertionError("Pallas BasicBlock (f32, auto tile) does not match reference")

    # f32, tiled L (2 tiles of 128 -> exercises the cross-tile boundary corrections)
    out_t = jax.block_until_ready(
        basic_block_pallas(x, w1, w2, g1, be1, m1, v1, g2, be2, m2, v2, tile_l=128))
    if not jnp.allclose(out_t, ref, atol=2e-2, rtol=2e-2):
        raise AssertionError("Pallas BasicBlock (f32, tiled) does not match reference")

    # bf16 HBM boundary + bf16 matmul operands, f32 accumulation / residual
    out_bf = basic_block_pallas(x.astype(jnp.bfloat16), w1, w2,
                                g1, be1, m1, v1, g2, be2, m2, v2,
                                compute_dtype=jnp.bfloat16, tile_l=128)
    out_bf = jax.block_until_ready(out_bf).astype(jnp.float32)
    if not jnp.allclose(out_bf, ref, atol=2e-1, rtol=2e-1):
        raise AssertionError("Pallas BasicBlock (bf16) sanity check failed")

    print("KERNEL_OK")
</pallas_src>

<mosaic_0001>
module attributes {stable_mosaic.version = 11 : i64} {
  func.func @basic_block_kernel(%arg0: i32, %arg1: i32, %arg2: memref<1x8x256xf32, #tpu.memory_space<vmem>>, %arg3: memref<1x1x8x2xf32, #tpu.memory_space<vmem>>, %arg4: memref<1x1x8x2xf32, #tpu.memory_space<vmem>>, %arg5: memref<3x8x8xf32, #tpu.memory_space<vmem>>, %arg6: memref<3x8x8xf32, #tpu.memory_space<vmem>>, %arg7: memref<8x1xf32, #tpu.memory_space<vmem>>, %arg8: memref<8x1xf32, #tpu.memory_space<vmem>>, %arg9: memref<1x8x256xf32, #tpu.memory_space<vmem>>) attributes {dimension_semantics = [#tpu.dimension_semantics<parallel>, #tpu.dimension_semantics<parallel>], iteration_bounds = array<i64: 2, 1>, scalar_prefetch = 0 : i64, scratch_operands = 0 : i64, tpu.core_type = #tpu.core_type<tc>, window_params = [{transform_indices = @transform_0, window_bounds = array<i64: 1, 8, 256>}, {transform_indices = @transform_1, window_bounds = array<i64: 1, 1, 8, 2>}, {transform_indices = @transform_2, window_bounds = array<i64: 1, 1, 8, 2>}, {pipeline_mode = #tpu.pipeline_mode<synchronous>, transform_indices = @transform_3, window_bounds = array<i64: 3, 8, 8>}, {pipeline_mode = #tpu.pipeline_mode<synchronous>, transform_indices = @transform_4, window_bounds = array<i64: 3, 8, 8>}, {pipeline_mode = #tpu.pipeline_mode<synchronous>, transform_indices = @transform_5, window_bounds = array<i64: 8, 1>}, {pipeline_mode = #tpu.pipeline_mode<synchronous>, transform_indices = @transform_6, window_bounds = array<i64: 8, 1>}, {transform_indices = @transform_7, window_bounds = array<i64: 1, 8, 256>}]} {
    %c0 = arith.constant 0 : index
    %c0_0 = arith.constant 0 : index
    %c0_1 = arith.constant 0 : index
    %0 = vector.load %arg2[%c0, %c0_0, %c0_1] : memref<1x8x256xf32, #tpu.memory_space<vmem>>, vector<1x8x256xf32>
    %1 = vector.shape_cast %0 : vector<1x8x256xf32> to vector<8x256xf32>
    %c0_2 = arith.constant 0 : index
    %c0_3 = arith.constant 0 : index
    %c0_4 = arith.constant 0 : index
    %2 = vector.load %arg2[%c0_2, %c0_3, %c0_4] : memref<1x8x256xf32, #tpu.memory_space<vmem>>, vector<1x8x256xf32>
    %3 = vector.shape_cast %2 : vector<1x8x256xf32> to vector<8x256xf32>
    %4 = tpu.iota {dimensions = array<i32: 1>} : vector<1x256xi32>
    %c0_i32 = arith.constant 0 : i32
    %5 = vector.broadcast %c0_i32 : i32 to vector<1x256xi32>
    %6 = arith.cmpi eq, %4, %5 : vector<1x256xi32>
    %7 = arith.extui %6 : vector<1x256xi1> to vector<1x256xi32>
    %8 = arith.sitofp %7 : vector<1x256xi32> to vector<1x256xf32>
    %c255_i32 = arith.constant 255 : i32
    %9 = vector.broadcast %c255_i32 : i32 to vector<1x256xi32>
    %10 = arith.cmpi eq, %4, %9 : vector<1x256xi32>
    %11 = arith.extui %10 : vector<1x256xi1> to vector<1x256xi32>
    %12 = arith.sitofp %11 : vector<1x256xi32> to vector<1x256xf32>
    %c1_i32 = arith.constant 1 : i32
    %13 = tpu.dynamic_rotate %3 by %c1_i32 dim 1 : vector<8x256xf32>, i32 -> vector<8x256xf32>
    %c255_i32_5 = arith.constant 255 : i32
    %14 = tpu.dynamic_rotate %3 by %c255_i32_5 dim 1 : vector<8x256xf32>, i32 -> vector<8x256xf32>
    %c0_6 = arith.constant 0 : index
    %c0_7 = arith.constant 0 : index
    %c0_8 = arith.constant 0 : index
    %15 = vector.load %arg5[%c0_6, %c0_7, %c0_8] : memref<3x8x8xf32, #tpu.memory_space<vmem>>, vector<1x8x8xf32>
    %16 = vector.shape_cast %15 : vector<1x8x8xf32> to vector<8x8xf32>
    %cst = arith.constant dense<0.000000e+00> : vector<8x256xf32>
    %17 = tpu.matmul %16, %13, %cst {dimension_numbers = #tpu.dot_dimension_numbers<[1], [0], [0], [1], [0, 0, 1, 1], [], []>} : vector<8x8xf32>, vector<8x256xf32>, vector<8x256xf32> -> vector<8x256xf32>
    %c1 = arith.constant 1 : index
    %c0_9 = arith.constant 0 : index
    %c0_10 = arith.constant 0 : index
    %18 = vector.load %arg5[%c1, %c0_9, %c0_10] : memref<3x8x8xf32, #tpu.memory_space<vmem>>, vector<1x8x8xf32>
    %19 = vector.shape_cast %18 : vector<1x8x8xf32> to vector<8x8xf32>
    %cst_11 = arith.constant dense<0.000000e+00> : vector<8x256xf32>
    %20 = tpu.matmul %19, %3, %cst_11 {dimension_numbers = #tpu.dot_dimension_numbers<[1], [0], [0], [1], [0, 0, 1, 1], [], []>} : vector<8x8xf32>, vector<8x256xf32>, vector<8x256xf32> -> vector<8x256xf32>
    %21 = arith.addf %17, %20 : vector<8x256xf32>
    %c2 = arith.constant 2 : index
    %c0_12 = arith.constant 0 : index
    %c0_13 = arith.constant 0 : index
    %22 = vector.load %arg5[%c2, %c0_12, %c0_13] : memref<3x8x8xf32, #tpu.memory_space<vmem>>, vector<1x8x8xf32>
    %23 = vector.shape_cast %22 : vector<1x8x8xf32> to vector<8x8xf32>
    %cst_14 = arith.constant dense<0.000000e+00> : vector<8x256xf32>
    %24 = tpu.matmul %23, %14, %cst_14 {dimension_numbers = #tpu.dot_dimension_numbers<[1], [0], [0], [1], [0, 0, 1, 1], [], []>} : vector<8x8xf32>, vector<8x256xf32>, vector<8x256xf32> -> vector<8x256xf32>
    %25 = arith.addf %21, %24 : vector<8x256xf32>
    %c0_15 = arith.constant 0 : index
    %c0_16 = arith.constant 0 : index
    %c0_17 = arith.constant 0 : index
    %c0_18 = arith.constant 0 : index
    %26 = vector.load %arg3[%c0_15, %c0_16, %c0_17, %c0_18] : memref<1x1x8x2xf32, #tpu.memory_space<vmem>>, vector<1x1x8x2xf32>
    %27 = vector.shape_cast %26 : vector<1x1x8x2xf32> to vector<8x2xf32>
    %c0_19 = arith.constant 0 : index
    %c0_20 = arith.constant 0 : index
    %28 = vector.load %arg7[%c0_19, %c0_20] : memref<8x1xf32, #tpu.memory_space<vmem>>, vector<8x1xf32>
    %29 = vector.broadcast %28 : vector<8x1xf32> to vector<8x256xf32>
    %30 = arith.addf %25, %29 : vector<8x256xf32>
    %31 = vector.extract_strided_slice %27 {offsets = [0, 0], sizes = [8, 1], strides = [1, 1]} : vector<8x2xf32> to vector<8x1xf32>
    %32 = vector.broadcast %31 : vector<8x1xf32> to vector<8x256xf32>
    %33 = vector.broadcast %8 : vector<1x256xf32> to vector<8x256xf32>
    %34 = arith.mulf %32, %33 : vector<8x256xf32>
    %35 = arith.addf %30, %34 : vector<8x256xf32>
    %36 = vector.extract_strided_slice %27 {offsets = [0, 1], sizes = [8, 1], strides = [1, 1]} : vector<8x2xf32> to vector<8x1xf32>
    %37 = vector.broadcast %36 : vector<8x1xf32> to vector<8x256xf32>
    %38 = vector.broadcast %12 : vector<1x256xf32> to vector<8x256xf32>
    %39 = arith.mulf %37, %38 : vector<8x256xf32>
    %40 = arith.addf %35, %39 : vector<8x256xf32>
    %cst_21 = arith.constant 0.000000e+00 : f32
    %41 = vector.broadcast %cst_21 : f32 to vector<8x256xf32>
    %42 = arith.maximumf %40, %41 : vector<8x256xf32>
    %c1_i32_22 = arith.constant 1 : i32
    %43 = tpu.dynamic_rotate %42 by %c1_i32_22 dim 1 : vector<8x256xf32>, i32 -> vector<8x256xf32>
    %c255_i32_23 = arith.constant 255 : i32
    %44 = tpu.dynamic_rotate %42 by %c255_i32_23 dim 1 : vector<8x256xf32>, i32 -> vector<8x256xf32>
    %c0_24 = arith.constant 0 : index
    %c0_25 = arith.constant 0 : index
    %c0_26 = arith.constant 0 : index
    %45 = vector.load %arg6[%c0_24, %c0_25, %c0_26] : memref<3x8x8xf32, #tpu.memory_space<vmem>>, vector<1x8x8xf32>
    %46 = vector.shape_cast %45 : vector<1x8x8xf32> to vector<8x8xf32>
    %cst_27 = arith.constant dense<0.000000e+00> : vector<8x256xf32>
    %47 = tpu.matmul %46, %43, %cst_27 {dimension_numbers = #tpu.dot_dimension_numbers<[1], [0], [0], [1], [0, 0, 1, 1], [], []>} : vector<8x8xf32>, vector<8x256xf32>, vector<8x256xf32> -> vector<8x256xf32>
    %c1_28 = arith.constant 1 : index
    %c0_29 = arith.constant 0 : index
    %c0_30 = arith.constant 0 : index
    %48 = vector.load %arg6[%c1_28, %c0_29, %c0_30] : memref<3x8x8xf32, #tpu.memory_space<vmem>>, vector<1x8x8xf32>
    %49 = vector.shape_cast %48 : vector<1x8x8xf32> to vector<8x8xf32>
    %cst_31 = arith.constant dense<0.000000e+00> : vector<8x256xf32>
    %50 = tpu.matmul %49, %42, %cst_31 {dimension_numbers = #tpu.dot_dimension_numbers<[1], [0], [0], [1], [0, 0, 1, 1], [], []>} : vector<8x8xf32>, vector<8x256xf32>, vector<8x256xf32> -> vector<8x256xf32>
    %51 = arith.addf %47, %50 : vector<8x256xf32>
    %c2_32 = arith.constant 2 : index
    %c0_33 = arith.constant 0 : index
    %c0_34 = arith.constant 0 : index
    %52 = vector.load %arg6[%c2_32, %c0_33, %c0_34] : memref<3x8x8xf32, #tpu.memory_space<vmem>>, vector<1x8x8xf32>
    %53 = vector.shape_cast %52 : vector<1x8x8xf32> to vector<8x8xf32>
    %cst_35 = arith.constant dense<0.000000e+00> : vector<8x256xf32>
    %54 = tpu.matmul %53, %44, %cst_35 {dimension_numbers = #tpu.dot_dimension_numbers<[1], [0], [0], [1], [0, 0, 1, 1], [], []>} : vector<8x8xf32>, vector<8x256xf32>, vector<8x256xf32> -> vector<8x256xf32>
    %55 = arith.addf %51, %54 : vector<8x256xf32>
    %c0_36 = arith.constant 0 : index
    %c0_37 = arith.constant 0 : index
    %c0_38 = arith.constant 0 : index
    %c0_39 = arith.constant 0 : index
    %56 = vector.load %arg4[%c0_36, %c0_37, %c0_38, %c0_39] : memref<1x1x8x2xf32, #tpu.memory_space<vmem>>, vector<1x1x8x2xf32>
    %57 = vector.shape_cast %56 : vector<1x1x8x2xf32> to vector<8x2xf32>
    %c0_40 = arith.constant 0 : index
    %c0_41 = arith.constant 0 : index
    %58 = vector.load %arg8[%c0_40, %c0_41] : memref<8x1xf32, #tpu.memory_space<vmem>>, vector<8x1xf32>
    %59 = vector.broadcast %58 : vector<8x1xf32> to vector<8x256xf32>
    %60 = arith.addf %55, %59 : vector<8x256xf32>
    %61 = vector.extract_strided_slice %57 {offsets = [0, 0], sizes = [8, 1], strides = [1, 1]} : vector<8x2xf32> to vector<8x1xf32>
    %62 = vector.broadcast %61 : vector<8x1xf32> to vector<8x256xf32>
    %63 = vector.broadcast %8 : vector<1x256xf32> to vector<8x256xf32>
    %64 = arith.mulf %62, %63 : vector<8x256xf32>
    %65 = arith.addf %60, %64 : vector<8x256xf32>
    %66 = vector.extract_strided_slice %57 {offsets = [0, 1], sizes = [8, 1], strides = [1, 1]} : vector<8x2xf32> to vector<8x1xf32>
    %67 = vector.broadcast %66 : vector<8x1xf32> to vector<8x256xf32>
    %68 = vector.broadcast %12 : vector<1x256xf32> to vector<8x256xf32>
    %69 = arith.mulf %67, %68 : vector<8x256xf32>
    %70 = arith.addf %65, %69 : vector<8x256xf32>
    %71 = arith.addf %70, %1 : vector<8x256xf32>
    %cst_42 = arith.constant 0.000000e+00 : f32
    %72 = vector.broadcast %cst_42 : f32 to vector<8x256xf32>
    %73 = arith.maximumf %71, %72 : vector<8x256xf32>
    %74 = vector.shape_cast %73 : vector<8x256xf32> to vector<1x8x256xf32>
    %c0_43 = arith.constant 0 : index
    %c0_44 = arith.constant 0 : index
    %c0_45 = arith.constant 0 : index
    %75 = vector.load %arg9[%c0_43, %c0_44, %c0_45] : memref<1x8x256xf32, #tpu.memory_space<vmem>>, vector<1x8x256xf32>
    tpu.vector_store %arg9[%c0_43, %c0_44, %c0_45], %74 {strides = array<i32>} : memref<1x8x256xf32, #tpu.memory_space<vmem>>, vector<1x8x256xf32>,
    return
  }
  func.func @transform_0(%arg0: i32, %arg1: i32) -> (i32, i32, i32) {
    %c0_i32 = arith.constant 0 : i32
    %c0_i32_0 = arith.constant 0 : i32
    return %arg0, %c0_i32, %arg1 : i32, i32, i32
  }
  func.func @transform_1(%arg0: i32, %arg1: i32) -> (i32, i32, i32, i32) {
    %c0_i32 = arith.constant 0 : i32
    %c0_i32_0 = arith.constant 0 : i32
    %c0_i32_1 = arith.constant 0 : i32
    return %arg0, %arg1, %c0_i32, %c0_i32_0 : i32, i32, i32, i32
  }
  func.func @transform_2(%arg0: i32, %arg1: i32) -> (i32, i32, i32, i32) {
    %c0_i32 = arith.constant 0 : i32
    %c0_i32_0 = arith.constant 0 : i32
    %c0_i32_1 = arith.constant 0 : i32
    return %arg0, %arg1, %c0_i32, %c0_i32_0 : i32, i32, i32, i32
  }
  func.func @transform_3(%arg0: i32, %arg1: i32) -> (i32, i32, i32) {
    %c0_i32 = arith.constant 0 : i32
    %c0_i32_0 = arith.constant 0 : i32
    %c0_i32_1 = arith.constant 0 : i32
    %c0_i32_2 = arith.constant 0 : i32
    return %c0_i32, %c0_i32_0, %c0_i32_1 : i32, i32, i32
  }
  func.func @transform_4(%arg0: i32, %arg1: i32) -> (i32, i32, i32) {
    %c0_i32 = arith.constant 0 : i32
    %c0_i32_0 = arith.constant 0 : i32
    %c0_i32_1 = arith.constant 0 : i32
    %c0_i32_2 = arith.constant 0 : i32
    return %c0_i32, %c0_i32_0, %c0_i32_1 : i32, i32, i32
  }
  func.func @transform_5(%arg0: i32, %arg1: i32) -> (i32, i32) {
    %c0_i32 = arith.constant 0 : i32
    %c0_i32_0 = arith.constant 0 : i32
    %c0_i32_1 = arith.constant 0 : i32
    return %c0_i32, %c0_i32_0 : i32, i32
  }
  func.func @transform_6(%arg0: i32, %arg1: i32) -> (i32, i32) {
    %c0_i32 = arith.constant 0 : i32
    %c0_i32_0 = arith.constant 0 : i32
    %c0_i32_1 = arith.constant 0 : i32
    return %c0_i32, %c0_i32_0 : i32, i32
  }
  func.func @transform_7(%arg0: i32, %arg1: i32) -> (i32, i32, i32) {
    %c0_i32 = arith.constant 0 : i32
    %c0_i32_0 = arith.constant 0 : i32
    return %arg0, %c0_i32, %arg1 : i32, i32, i32
  }
}

</mosaic_0001>

<llo_original>
// kernel: basic_block_pallas.1
$region0: #{basic_block_pallas.1}
  #allocation0 [shape = 'u32[]', space=smem, size = 0x4, offset = 0x4, fixed_abs, tag = 'smem constant byte address 0x4 - core index']
  #allocation1 [shape = 'u32[144,128]{1,0:T(1,128)}', space=vmem, size = 0x12000, scoped, tag = 'internal scratch']
  %s0 = inlined_call_operand.vmem [shape: f32[2,8,256], index: 0, kind: input, shape index: {}]
  %s1 = inlined_call_operand.vmem [shape: f32[2,1,8,2], index: 1, kind: input, shape index: {}]
  %s2 = inlined_call_operand.vmem [shape: f32[2,1,8,2], index: 2, kind: input, shape index: {}]
  %s3 = inlined_call_operand.vmem [shape: f32[3,8,8], index: 3, kind: input, shape index: {}]
  %s4 = inlined_call_operand.vmem [shape: f32[3,8,8], index: 4, kind: input, shape index: {}]
  %s5 = inlined_call_operand.vmem [shape: f32[8,1], index: 5, kind: input, shape index: {}]
  %s6 = inlined_call_operand.vmem [shape: f32[8,1], index: 6, kind: input, shape index: {}]
  %s7 = inlined_call_operand.hbm [shape: f32[2,8,256], index: 7, kind: output, shape index: {}]
  %s8 = sld [smem:[#allocation0]]
  $region61: #{basic_block_pallas.1} parent=0
    _
  %s10 = ssub.s32 1, %s8
  %s11 = scalar_select 0, %s10, %s8
  $region1: #{basic_block_pallas.1} parent=0
    #allocation2 [shape = 'u8[16384]{0}', space=vmem, size = 0x4000, scoped, tag = 'output window, operand 0']
    #allocation3 [shape = 's32[2]{0}', space=sflag, size = 0x8, scoped, tag = 'scoped memory for basic_block_pallas.1']
    %12 = vsyncpa [#allocation3], 0
    %s13 = scalar_lea.sflag [#allocation3], 1
    %14 = vsyncpa %s13, 0
    loop: start=0, step=1, limit=4
    $region2: #{basic_block_pallas.1} parent=1 // loop_pre_header
      _
    $region3: #{basic_block_pallas.1} parent=1 // loop_header
      %s16 = sphi 0, %s20
      %p17 = scmp.ge.s32.totalorder %s16, 4
      %s23 = sphi 0, %s35
      %s24 = sphi 0, %s31
      %s25 = sphi 0, %s23
      %s26 = sphi 0, %s24
      %s27 = sphi 0, %s25
      %s28 = sphi 0, %s26
      %s40 = sphi 0, %s42
      %s43 = sphi 0, %s40
      %s44 = sphi 0, %s43
      %s60 = sphi 0, %s44
      %s68 = sphi 0, %s70
      %s71 = sphi 0, %s68
      %s72 = sphi 0, %s71
      %s88 = sphi 0, %s72
      %s96 = sphi 0, %s98
      %s99 = sphi 0, %s96
      %s100 = sphi 0, %s99
      %s116 = sphi 0, %s100
      %s120 = sphi 0, %s120
      %s122 = sphi 0, %s120
      %s123 = sphi 0, %s122
      %s137 = sphi 0, %s123
      %s141 = sphi 0, %s141
      %s143 = sphi 0, %s141
      %s144 = sphi 0, %s143
      %s158 = sphi 0, %s144
      %s162 = sphi 0, %s162
      %s164 = sphi 0, %s162
      %s165 = sphi 0, %s164
      %s179 = sphi 0, %s165
      %s183 = sphi 0, %s183
      %s185 = sphi 0, %s183
      %s186 = sphi 0, %s185
      %s200 = sphi 0, %s186
      %s208 = sphi 0, %s210
      %s211 = sphi 0, %s208
      %s212 = sphi 0, %s211
      %s228 = sphi 0, %s212
    $region4: #{basic_block_pallas.1} parent=1 // loop_header_branch
      %19 = sbr.rel (%p17) target = $region8
    $region5: #{basic_block_pallas.1} parent=1 // loop_body
      %s21 = ssub.s32 %s16, 1
      %s22 = ssub.s32 %s16, 2
      %s29 = sadd.s32 1, %s24
      %p30 = scmp.ge.s32.totalorder %s29, 1
      %s31 = scalar_select %p30, 0, %s29
      %s32 = sadd.s32 1, %s23
      %s33 = scalar_select %p30, %s32, %s23
      %p34 = scmp.ge.s32.totalorder %s33, 2
      %s35 = scalar_select %p34, 0, %s33
      %s36 = ssub.s32 %s23, %s35
      %s37 = ssub.s32 %s24, %s31
      %s38 = sor.u32 %s36, %s37
      %p39 = scmp.eq.s32.totalorder %s38, 0
      %s41 = sadd.s32 %s40, 1
      %s42 = scalar_select %p39, %s40, %s41
      %p45 = pneg %p39
      %p46 = scmp.eq.s32.totalorder %s16, 1
      %p47 = por %p45, %p46
      %p48 = scmp.ne.s32.totalorder %s40, %s43
      %p49 = scmp.eq.s32.totalorder %s16, 0
      %p50 = por %p48, %p49
      %p51 = scmp.ne.s32.totalorder %s40, %s43
      %p52 = scmp.eq.s32.totalorder %s21, 1
      %p53 = por %p51, %p52
      %p54 = scmp.ne.s32.totalorder %s43, %s44
      %p55 = scmp.eq.s32.totalorder %s21, 0
      %p56 = por %p54, %p55
      %p57 = scmp.ne.s32.totalorder %s43, %s44
      %p58 = scmp.eq.s32.totalorder %s22, 1
      %p59 = por %p57, %p58
      %p61 = scmp.ne.s32.totalorder %s44, %s60
      %p62 = scmp.eq.s32.totalorder %s22, 0
      %p63 = por %p61, %p62
      %s64 = ssub.s32 %s23, %s35
      %s65 = ssub.s32 %s24, %s31
      %s66 = sor.u32 %s64, %s65
      %p67 = scmp.eq.s32.totalorder %s66, 0
      %s69 = sadd.s32 %s68, 1
      %s70 = scalar_select %p67, %s68, %s69
      %p73 = pneg %p67
      %p74 = scmp.eq.s32.totalorder %s16, 1
      %p75 = por %p73, %p74
      %p76 = scmp.ne.s32.totalorder %s68, %s71
      %p77 = scmp.eq.s32.totalorder %s16, 0
      %p78 = por %p76, %p77
      %p79 = scmp.ne.s32.totalorder %s68, %s71
      %p80 = scmp.eq.s32.totalorder %s21, 1
      %p81 = por %p79, %p80
      %p82 = scmp.ne.s32.totalorder %s71, %s72
      %p83 = scmp.eq.s32.totalorder %s21, 0
      %p84 = por %p82, %p83
      %p85 = scmp.ne.s32.totalorder %s71, %s72
      %p86 = scmp.eq.s32.totalorder %s22, 1
      %p87 = por %p85, %p86
      %p89 = scmp.ne.s32.totalorder %s72, %s88
      %p90 = scmp.eq.s32.totalorder %s22, 0
      %p91 = por %p89, %p90
      %s92 = ssub.s32 %s23, %s35
      %s93 = ssub.s32 %s24, %s31
      %s94 = sor.u32 %s92, %s93
      %p95 = scmp.eq.s32.totalorder %s94, 0
      %s97 = sadd.s32 %s96, 1
      %s98 = scalar_select %p95, %s96, %s97
      %p101 = pneg %p95
      %p102 = scmp.eq.s32.totalorder %s16, 1
      %p103 = por %p101, %p102
      %p104 = scmp.ne.s32.totalorder %s96, %s99
      %p105 = scmp.eq.s32.totalorder %s16, 0
      %p106 = por %p104, %p105
      %p107 = scmp.ne.s32.totalorder %s96, %s99
      %p108 = scmp.eq.s32.totalorder %s21, 1
      %p109 = por %p107, %p108
      %p110 = scmp.ne.s32.totalorder %s99, %s100
      %p111 = scmp.eq.s32.totalorder %s21, 0
      %p112 = por %p110, %p111
      %p113 = scmp.ne.s32.totalorder %s99, %s100
      %p114 = scmp.eq.s32.totalorder %s22, 1
      %p115 = por %p113, %p114
      %p117 = scmp.ne.s32.totalorder %s100, %s116
      %p118 = scmp.eq.s32.totalorder %s22, 0
      %p119 = por %p117, %p118
      %s121 = sadd.s32 %s120, 1
      %p124 = scmp.eq.s32.totalorder %s16, 1
      %p125 = scmp.ne.s32.totalorder %s120, %s122
      %p126 = scmp.eq.s32.totalorder %s16, 0
      %p127 = por %p125, %p126
      %p128 = scmp.ne.s32.totalorder %s120, %s122
      %p129 = scmp.eq.s32.totalorder %s21, 1
      %p130 = por %p128, %p129
      %p131 = scmp.ne.s32.totalorder %s122, %s123
      %p132 = scmp.eq.s32.totalorder %s21, 0
      %p133 = por %p131, %p132
      %p134 = scmp.ne.s32.totalorder %s122, %s123
      %p135 = scmp.eq.s32.totalorder %s22, 1
      %p136 = por %p134, %p135
      %p138 = scmp.ne.s32.totalorder %s123, %s137
      %p139 = scmp.eq.s32.totalorder %s22, 0
      %p140 = por %p138, %p139
      %s142 = sadd.s32 %s141, 1
      %p145 = scmp.eq.s32.totalorder %s16, 1
      %p146 = scmp.ne.s32.totalorder %s141, %s143
      %p147 = scmp.eq.s32.totalorder %s16, 0
      %p148 = por %p146, %p147
      %p149 = scmp.ne.s32.totalorder %s141, %s143
      %p150 = scmp.eq.s32.totalorder %s21, 1
      %p151 = por %p149, %p150
      %p152 = scmp.ne.s32.totalorder %s143, %s144
      %p153 = scmp.eq.s32.totalorder %s21, 0
      %p154 = por %p152, %p153
      %p155 = scmp.ne.s32.totalorder %s143, %s144
      %p156 = scmp.eq.s32.totalorder %s22, 1
      %p157 = por %p155, %p156
      %p159 = scmp.ne.s32.totalorder %s144, %s158
      %p160 = scmp.eq.s32.totalorder %s22, 0
      %p161 = por %p159, %p160
      %s163 = sadd.s32 %s162, 1
      %p166 = scmp.eq.s32.totalorder %s16, 1
      %p167 = scmp.ne.s32.totalorder %s162, %s164
      %p168 = scmp.eq.s32.totalorder %s16, 0
      %p169 = por %p167, %p168
      %p170 = scmp.ne.s32.totalorder %s162, %s164
      %p171 = scmp.eq.s32.totalorder %s21, 1
      %p172 = por %p170, %p171
      %p173 = scmp.ne.s32.totalorder %s164, %s165
      %p174 = scmp.eq.s32.totalorder %s21, 0
      %p175 = por %p173, %p174
      %p176 = scmp.ne.s32.totalorder %s164, %s165
      %p177 = scmp.eq.s32.totalorder %s22, 1
      %p178 = por %p176, %p177
      %p180 = scmp.ne.s32.totalorder %s165, %s179
      %p181 = scmp.eq.s32.totalorder %s22, 0
      %p182 = por %p180, %p181
      %s184 = sadd.s32 %s183, 1
      %p187 = scmp.eq.s32.totalorder %s16, 1
      %p188 = scmp.ne.s32.totalorder %s183, %s185
      %p189 = scmp.eq.s32.totalorder %s16, 0
      %p190 = por %p188, %p189
      %p191 = scmp.ne.s32.totalorder %s183, %s185
      %p192 = scmp.eq.s32.totalorder %s21, 1
      %p193 = por %p191, %p192
      %p194 = scmp.ne.s32.totalorder %s185, %s186
      %p195 = scmp.eq.s32.totalorder %s21, 0
      %p196 = por %p194, %p195
      %p197 = scmp.ne.s32.totalorder %s185, %s186
      %p198 = scmp.eq.s32.totalorder %s22, 1
      %p199 = por %p197, %p198
      %p201 = scmp.ne.s32.totalorder %s186, %s200
      %p202 = scmp.eq.s32.totalorder %s22, 0
      %p203 = por %p201, %p202
      %s204 = ssub.s32 %s23, %s35
      %s205 = ssub.s32 %s24, %s31
      %s206 = sor.u32 %s204, %s205
      %p207 = scmp.eq.s32.totalorder %s206, 0
      %s209 = sadd.s32 %s208, 1
      %s210 = scalar_select %p207, %s208, %s209
      %p213 = pneg %p207
      %p214 = scmp.eq.s32.totalorder %s16, 1
      %p215 = por %p213, %p214
      %p216 = scmp.ne.s32.totalorder %s208, %s211
      %p217 = scmp.eq.s32.totalorder %s16, 0
      %p218 = por %p216, %p217
      %p219 = scmp.ne.s32.totalorder %s208, %s211
      %p220 = scmp.eq.s32.totalorder %s21, 1
      %p221 = por %p219, %p220
      %p222 = scmp.ne.s32.totalorder %s211, %s212
      %p223 = scmp.eq.s32.totalorder %s21, 0
      %p224 = por %p222, %p223
      %p225 = scmp.ne.s32.totalorder %s211, %s212
      %p226 = scmp.eq.s32.totalorder %s22, 1
      %p227 = por %p225, %p226
      %p229 = scmp.ne.s32.totalorder %s212, %s228
      %p230 = scmp.eq.s32.totalorder %s22, 0
      %p231 = por %p229, %p230
      %p232 = scmp.le.s32.totalorder 1, %s16
      %p233 = scmp.lt.s32.totalorder %s16, 3
      %p234 = pnand %p232, %p233
      %p235 = pneg %p234
      // Predicated region
      $region9: #{basic_block_pallas.1} parent=5 // pred_check
        _
      $region10: #{basic_block_pallas.1} parent=5 // pred_check_branch
        %237 = sbr.rel (%p234) target = $region12
      $region11: #{basic_block_pallas.1} parent=5 // pred_region
        %s238 = ssub.s32 %s16, 1
        // Predicated region
        $region13: #{basic_block_pallas.1} parent=11 // pred_check
          %p239 = pneg %p133
        $region14: #{basic_block_pallas.1} parent=11 // pred_check_branch
          %241 = sbr.rel (%p239) target = $region16
        $region15: #{basic_block_pallas.1} parent=11 // pred_region
          _
        $region16: #{basic_block_pallas.1} parent=11 // pred_fallthru
          _
        // Predicated region
        $region17: #{basic_block_pallas.1} parent=11 // pred_check
          %p242 = pneg %p154
        $region18: #{basic_block_pallas.1} parent=11 // pred_check_branch
          %244 = sbr.rel (%p242) target = $region20
        $region19: #{basic_block_pallas.1} parent=11 // pred_region
          _
        $region20: #{basic_block_pallas.1} parent=11 // pred_fallthru
          _
        // Predicated region
        $region21: #{basic_block_pallas.1} parent=11 // pred_check
          %p245 = pneg %p175
        $region22: #{basic_block_pallas.1} parent=11 // pred_check_branch
          %247 = sbr.rel (%p245) target = $region24
        $region23: #{basic_block_pallas.1} parent=11 // pred_region
          _
        $region24: #{basic_block_pallas.1} parent=11 // pred_fallthru
          _
        // Predicated region
        $region25: #{basic_block_pallas.1} parent=11 // pred_check
          %p248 = pneg %p196
        $region26: #{basic_block_pallas.1} parent=11 // pred_check_branch
          %250 = sbr.rel (%p248) target = $region28
        $region27: #{basic_block_pallas.1} parent=11 // pred_region
          _
        $region28: #{basic_block_pallas.1} parent=11 // pred_fallthru
          _
      $region12: #{basic_block_pallas.1} parent=5 // pred_fallthru
        _
      %p251 = scmp.lt.s32.totalorder %s16, 2
      // Predicated region
      $region29: #{basic_block_pallas.1} parent=5 // pred_check
        %p252 = pneg %p251
      $region30: #{basic_block_pallas.1} parent=5 // pred_check_branch
        %254 = sbr.rel (%p252) target = $region32
      $region31: #{basic_block_pallas.1} parent=5 // pred_region
        // Predicated region
        $region33: #{basic_block_pallas.1} parent=31 // pred_check
          %p255 = pneg %p50
        $region34: #{basic_block_pallas.1} parent=31 // pred_check_branch
          %257 = sbr.rel (%p255) target = $region36
        $region35: #{basic_block_pallas.1} parent=31 // pred_region
          %s258 = smul.u32 2, %s24
          %p259 = scmp.lt.s32.totalorder %s23, 1
          %s260 = scalar_select %p259, %s23, 1
          %p261 = scmp.lt.s32.totalorder %s258, 1
          %s262 = scalar_select %p261, %s258, 1
          %s263 = smul.addr %s260, 2
          %s264 = sadd.s32 %s262, %s263
          %s265 = smul.addr %s264, 8
          %s266 = scalar_lea.vmem %s0, %s265
          %s267 = smul.u32 2, %s24
        $region36: #{basic_block_pallas.1} parent=31 // pred_fallthru
          _
        // Predicated region
        $region37: #{basic_block_pallas.1} parent=31 // pred_check
          %p268 = pneg %p78
        $region38: #{basic_block_pallas.1} parent=31 // pred_check_branch
          %270 = sbr.rel (%p268) target = $region40
        $region39: #{basic_block_pallas.1} parent=31 // pred_region
          %p271 = scmp.lt.s32.totalorder %s23, 1
          %s272 = scalar_select %p271, %s23, 1
          %p273 = scmp.lt.s32.totalorder %s24, 0
          %s274 = scalar_select %p273, %s24, 0
          %s275 = sadd.s32 %s274, %s272
          %s276 = smul.addr %s275, 8
          %s277 = scalar_lea.vmem %s1, %s276
        $region40: #{basic_block_pallas.1} parent=31 // pred_fallthru
          _
        // Predicated region
        $region41: #{basic_block_pallas.1} parent=31 // pred_check
          %p278 = pneg %p106
        $region42: #{basic_block_pallas.1} parent=31 // pred_check_branch
          %280 = sbr.rel (%p278) target = $region44
        $region43: #{basic_block_pallas.1} parent=31 // pred_region
          %p281 = scmp.lt.s32.totalorder %s23, 1
          %s282 = scalar_select %p281, %s23, 1
          %p283 = scmp.lt.s32.totalorder %s24, 0
          %s284 = scalar_select %p283, %s24, 0
          %s285 = sadd.s32 %s284, %s282
          %s286 = smul.addr %s285, 8
          %s287 = scalar_lea.vmem %s2, %s286
        $region44: #{basic_block_pallas.1} parent=31 // pred_fallthru
          _
      $region32: #{basic_block_pallas.1} parent=5 // pred_fallthru
        _
      %p288 = scmp.le.s32.totalorder 1, %s16
      %p289 = scmp.lt.s32.totalorder %s16, 3
      %p290 = pnand %p288, %p289
      %p291 = pneg %p290
      // Predicated region
      $region45: #{basic_block_pallas.1} parent=5 // pred_check
        _
      $region46: #{basic_block_pallas.1} parent=5 // pred_check_branch
        %293 = sbr.rel (%p290) target = $region48
      $region47: #{basic_block_pallas.1} parent=5 // pred_region
        %s294 = ssub.s32 %s16, 1
        %s295 = smul.u32 2, %s26
        %p296 = scmp.lt.s32.totalorder %s25, 1
        %s297 = scalar_select %p296, %s25, 1
        %p298 = scmp.lt.s32.totalorder %s295, 1
        %s299 = scalar_select %p298, %s295, 1
        %s300 = smul.addr %s297, 2
        %s301 = sadd.s32 %s299, %s300
        %s302 = smul.addr %s301, 8
        %s303 = scalar_lea.vmem %s0, %s302
        %p304 = pneg %p56
        %p305 = pneg %p53
        %p306 = scmp.lt.s32.totalorder %s25, 1
        %s307 = scalar_select %p306, %s25, 1
        %p308 = scmp.lt.s32.totalorder %s26, 0
        %s309 = scalar_select %p308, %s26, 0
        %s310 = sadd.s32 %s309, %s307
        %s311 = smul.addr %s310, 8
        %s312 = scalar_lea.vmem %s1, %s311
        %p313 = pneg %p84
        %p314 = pneg %p81
        %p315 = scmp.lt.s32.totalorder %s25, 1
        %s316 = scalar_select %p315, %s25, 1
        %p317 = scmp.lt.s32.totalorder %s26, 0
        %s318 = scalar_select %p317, %s26, 0
        %s319 = sadd.s32 %s318, %s316
        %s320 = smul.addr %s319, 8
        %s321 = scalar_lea.vmem %s2, %s320
        %p322 = pneg %p112
        %p323 = pneg %p109
        %p324 = pneg %p133
        %p325 = pneg %p130
        %p326 = pneg %p154
        %p327 = pneg %p151
        %p328 = pneg %p175
        %p329 = pneg %p172
        %p330 = pneg %p196
        %p331 = pneg %p193
        %p332 = pneg %p224
        %p333 = pneg %p221
        %s334 = sand.u32 %s211, 1
        %s335 = scalar_lea.sflag [#allocation3], %s334
        %s336 = sand.u32 %s211, 1
        %s337 = smul.addr %s336, 16
        %s338 = scalar_lea.vmem [#allocation2], %s337
        %s339 = smul.u32 2, %s26
        %p340 = scmp.lt.s32.totalorder %s25, 1
        %s341 = scalar_select %p340, %s25, 1
        %p342 = scmp.lt.s32.totalorder %s339, 1
        %s343 = scalar_select %p342, %s339, 1
        %s344 = smul.addr %s341, 2
        %s345 = sadd.s32 %s343, %s344
        %s346 = smul.addr %s345, 8
        %s347 = scalar_lea.vmem %s0, %s346
        %s348 = smul.u32 2, %s26
        %p349 = scmp.lt.s32.totalorder %s25, 1
        %s350 = scalar_select %p349, %s25, 1
        %p351 = scmp.lt.s32.totalorder %s26, 0
        %s352 = scalar_select %p351, %s26, 0
        %s353 = sadd.s32 %s352, %s350
        %s354 = smul.addr %s353, 8
        %s355 = scalar_lea.vmem %s1, %s354
        %p356 = scmp.lt.s32.totalorder %s25, 1
        %s357 = scalar_select %p356, %s25, 1
        %p358 = scmp.lt.s32.totalorder %s26, 0
        %s359 = scalar_select %p358, %s26, 0
        %s360 = sadd.s32 %s359, %s357
        %s361 = smul.addr %s360, 8
        %s362 = scalar_lea.vmem %s2, %s361
        %s363 = smul.u32 2, %s26
        %v364 = vld [vmem:[%s347] sm:$0xff]
        %v365 = vld [vmem:[%s347 + $0x8] sm:$0xff]
        %v366 = vlaneseq
        %v367 = vand.u32 %v366, 127
        %v368 = vadd.s32 %v367, 128
        %vm369 = vcmp.eq.s32.totalorder %v367, 0
        %vm370 = vcmp.eq.s32.totalorder %v368, 0
        %v371 = vsel %vm369, 1, 0
        %v372 = vsel %vm370, 1, 0
        %v373 = vcvt.s32.f32 %v371
        %v374 = vcvt.s32.f32 %v372
        %vm375 = vcmp.eq.s32.totalorder %v367, 255
        %vm376 = vcmp.eq.s32.totalorder %v368, 255
        %v377 = vsel %vm375, 1, 0
        %v378 = vsel %vm376, 1, 0
        %v379 = vcvt.s32.f32 %v377
        %v380 = vcvt.s32.f32 %v378
        %381 = vrot.lane.b32.xlu0 %v364, 1
        %v382 = vpop.permute.xlu0 %381
        %383 = vrot.lane.b32.xlu0 %v365, 1
        %v384 = vpop.permute.xlu0 %383
        %vm385 = vcmp.lt.s32.totalorder %v367, 1
        %v386 = vsel %vm385, %v382, %v384
        %v387 = vsel %vm385, %v384, %v382
        %388 = vrot.lane.b32.xlu0 %v364, 127
        %v389 = vpop.permute.xlu0 %388
        %390 = vrot.lane.b32.xlu0 %v365, 127
        %v391 = vpop.permute.xlu0 %390
        %vm392 = vcmp.lt.s32.totalorder %v367, 127
        %v393 = vsel %vm392, %v389, %v391
        %v394 = vsel %vm392, %v391, %v389
        %v395 = vld [vmem:[%s3] sm:$0xff]
        %s396 = scalar_lea.vmem %s3, 8
        %v397 = vld [vmem:[%s396] sm:$0xff]
        %vm398 = vcmask 64512
        %v400 = vsel %vm398, %v397, 0
        %402 = vmatprep.subr.mxu0 0.0
        %403 = vmatpush1.msra.mxu0 0.0
        %404 = vmatprep.subr.mxu0 0.0
        %405 = vmatpush1.msra.mxu0 0.0
        %406 = vmatprep.subr.mxu0 0.0
        %407 = vmatpush1.msra.mxu0 0.0
        %408 = vmatprep.subr.mxu0 0.0
        %409 = vmatpush1.msra.mxu0 0.0
        %410 = vmatprep.subr.mxu0 0.0
        %411 = vmatpush1.msra.mxu0 0.0
        %412 = vmatprep.subr.mxu0 0.0
        %413 = vmatpush1.msra.mxu0 0.0
        %414 = vmatprep.subr.mxu0 0.0
        %415 = vmatpush1.msra.mxu0 0.0
        %416 = vmatprep.subr.mxu0 0.0
        %417 = vmatpush1.msra.mxu0 0.0
        %418 = vmatprep.subr.mxu0 0.0
        %419 = vmatpush1.msra.mxu0 0.0
        %420 = vmatprep.subr.mxu0 0.0
        %421 = vmatpush1.msra.mxu0 0.0
        %422 = vmatprep.subr.mxu0 0.0
        %423 = vmatpush1.msra.mxu0 0.0
        %424 = vmatprep.subr.mxu0 0.0
        %425 = vmatpush1.msra.mxu0 0.0
        %426 = vmatprep.subr.mxu0 0.0
        %427 = vmatpush1.msra.mxu0 0.0
        %428 = vmatprep.subr.mxu0 0.0
        %429 = vmatpush1.msra.mxu0 0.0
        %430 = vmatprep.subr.mxu0 0.0
        %431 = vmatpush1.msra.mxu0 0.0
        %432 = vmatprep.subr.mxu0 %v365
        %433 = vmatpush1.msra.mxu0 %v364
        %434 = vmatprep.subr.mxu0 0.0
        %435 = vmatpush2.msra.mxu0 0.0
        %436 = vmatprep.subr.mxu0 0.0
        %437 = vmatpush2.msra.mxu0 0.0
        %438 = vmatprep.subr.mxu0 0.0
        %439 = vmatpush2.msra.mxu0 0.0
        %440 = vmatprep.subr.mxu0 0.0
        %441 = vmatpush2.msra.mxu0 0.0
        %442 = vmatprep.subr.mxu0 0.0
        %443 = vmatpush2.msra.mxu0 0.0
        %444 = vmatprep.subr.mxu0 0.0
        %445 = vmatpush2.msra.mxu0 0.0
        %446 = vmatprep.subr.mxu0 0.0
        %447 = vmatpush2.msra.mxu0 0.0
        %448 = vmatprep.subr.mxu0 0.0
        %449 = vmatpush2.msra.mxu0 0.0
        %450 = vmatprep.subr.mxu0 0.0
        %451 = vmatpush2.msra.mxu0 0.0
        %452 = vmatprep.subr.mxu0 0.0
        %453 = vmatpush2.msra.mxu0 0.0
        %454 = vmatprep.subr.mxu0 0.0
        %455 = vmatpush2.msra.mxu0 0.0
        %456 = vmatprep.subr.mxu0 0.0
        %457 = vmatpush2.msra.mxu0 0.0
        %458 = vmatprep.subr.mxu0 0.0
        %459 = vmatpush2.msra.mxu0 0.0
        %460 = vmatprep.subr.mxu0 0.0
        %461 = vmatpush2.msra.mxu0 0.0
        %462 = vmatprep.subr.mxu0 0.0
        %463 = vmatpush2.msra.mxu0 0.0
        %464 = vmatprep.subr.mxu0 0.0
        %465 = vmatpush2.msra.mxu0 0.0
        %466 = vmatprep.mubr.f32.mxu0 0.0
        %467 = vmatmul.mubr.f32.gmra.mxu0 %v400
        %v468 = vpop.f32.mrf.mxu0
        %v469 = vadd.f32 0.0, %v468
        %v470 = vpop.f32.mrf.mxu0
        %v471 = vadd.f32 0.0, %v470
        %472 = vdwg.mxu0
        %v474 = vsel %vm398, %v395, 0
        %476 = vmatprep.subr.mxu0 0.0
        %477 = vmatpush1.msra.mxu0 0.0
        %478 = vmatprep.subr.mxu0 0.0
        %479 = vmatpush1.msra.mxu0 0.0
        %480 = vmatprep.subr.mxu0 0.0
        %481 = vmatpush1.msra.mxu0 0.0
        %482 = vmatprep.subr.mxu0 0.0
        %483 = vmatpush1.msra.mxu0 0.0
        %484 = vmatprep.subr.mxu0 0.0
        %485 = vmatpush1.msra.mxu0 0.0
        %486 = vmatprep.subr.mxu0 0.0
        %487 = vmatpush1.msra.mxu0 0.0
        %488 = vmatprep.subr.mxu0 0.0
        %489 = vmatpush1.msra.mxu0 0.0
        %490 = vmatprep.subr.mxu0 0.0
        %491 = vmatpush1.msra.mxu0 0.0
        %492 = vmatprep.subr.mxu0 0.0
        %493 = vmatpush1.msra.mxu0 0.0
        %494 = vmatprep.subr.mxu0 0.0
        %495 = vmatpush1.msra.mxu0 0.0
        %496 = vmatprep.subr.mxu0 0.0
        %497 = vmatpush1.msra.mxu0 0.0
        %498 = vmatprep.subr.mxu0 0.0
        %499 = vmatpush1.msra.mxu0 0.0
        %500 = vmatprep.subr.mxu0 0.0
        %501 = vmatpush1.msra.mxu0 0.0
        %502 = vmatprep.subr.mxu0 0.0
        %503 = vmatpush1.msra.mxu0 0.0
        %504 = vmatprep.subr.mxu0 0.0
        %505 = vmatpush1.msra.mxu0 0.0
        %506 = vmatprep.subr.mxu0 %v386
        %507 = vmatpush1.msra.mxu0 %v387
        %508 = vmatprep.subr.mxu0 0.0
        %509 = vmatpush2.msra.mxu0 0.0
        %510 = vmatprep.subr.mxu0 0.0
        %511 = vmatpush2.msra.mxu0 0.0
        %512 = vmatprep.subr.mxu0 0.0
        %513 = vmatpush2.msra.mxu0 0.0
        %514 = vmatprep.subr.mxu0 0.0
        %515 = vmatpush2.msra.mxu0 0.0
        %516 = vmatprep.subr.mxu0 0.0
        %517 = vmatpush2.msra.mxu0 0.0
        %518 = vmatprep.subr.mxu0 0.0
        %519 = vmatpush2.msra.mxu0 0.0
        %520 = vmatprep.subr.mxu0 0.0
        %521 = vmatpush2.msra.mxu0 0.0
        %522 = vmatprep.subr.mxu0 0.0
        %523 = vmatpush2.msra.mxu0 0.0
        %524 = vmatprep.subr.mxu0 0.0
        %525 = vmatpush2.msra.mxu0 0.0
        %526 = vmatprep.subr.mxu0 0.0
        %527 = vmatpush2.msra.mxu0 0.0
        %528 = vmatprep.subr.mxu0 0.0
        %529 = vmatpush2.msra.mxu0 0.0
        %530 = vmatprep.subr.mxu0 0.0
        %531 = vmatpush2.msra.mxu0 0.0
        %532 = vmatprep.subr.mxu0 0.0
        %533 = vmatpush2.msra.mxu0 0.0
        %534 = vmatprep.subr.mxu0 0.0
        %535 = vmatpush2.msra.mxu0 0.0
        %536 = vmatprep.subr.mxu0 0.0
        %537 = vmatpush2.msra.mxu0 0.0
        %538 = vmatprep.subr.mxu0 0.0
        %539 = vmatpush2.msra.mxu0 0.0
        %540 = vmatprep.mubr.f32.mxu0 0.0
        %541 = vmatmul.mubr.f32.gmra.mxu0 %v474
        %v542 = vpop.f32.mrf.mxu0
        %v543 = vadd.f32 %v469, %v542
        %v544 = vpop.f32.mrf.mxu0
        %v545 = vadd.f32 %v471, %v544
        %546 = vdwg.mxu0
        %s547 = scalar_lea.vmem %s3, 16
        %v548 = vld [vmem:[%s547] sm:$0xff]
        %v550 = vsel %vm398, %v548, 0
        %552 = vmatprep.subr.mxu0 0.0
        %553 = vmatpush1.msra.mxu0 0.0
        %554 = vmatprep.subr.mxu0 0.0
        %555 = vmatpush1.msra.mxu0 0.0
        %556 = vmatprep.subr.mxu0 0.0
        %557 = vmatpush1.msra.mxu0 0.0
        %558 = vmatprep.subr.mxu0 0.0
        %559 = vmatpush1.msra.mxu0 0.0
        %560 = vmatprep.subr.mxu0 0.0
        %561 = vmatpush1.msra.mxu0 0.0
        %562 = vmatprep.subr.mxu0 0.0
        %563 = vmatpush1.msra.mxu0 0.0
        %564 = vmatprep.subr.mxu0 0.0
        %565 = vmatpush1.msra.mxu0 0.0
        %566 = vmatprep.subr.mxu0 0.0
        %567 = vmatpush1.msra.mxu0 0.0
        %568 = vmatprep.subr.mxu0 0.0
        %569 = vmatpush1.msra.mxu0 0.0
        %570 = vmatprep.subr.mxu0 0.0
        %571 = vmatpush1.msra.mxu0 0.0
        %572 = vmatprep.subr.mxu0 0.0
        %573 = vmatpush1.msra.mxu0 0.0
        %574 = vmatprep.subr.mxu0 0.0
        %575 = vmatpush1.msra.mxu0 0.0
        %576 = vmatprep.subr.mxu0 0.0
        %577 = vmatpush1.msra.mxu0 0.0
        %578 = vmatprep.subr.mxu0 0.0
        %579 = vmatpush1.msra.mxu0 0.0
        %580 = vmatprep.subr.mxu0 0.0
        %581 = vmatpush1.msra.mxu0 0.0
        %582 = vmatprep.subr.mxu0 %v394
        %583 = vmatpush1.msra.mxu0 %v393
        %584 = vmatprep.subr.mxu0 0.0
        %585 = vmatpush2.msra.mxu0 0.0
        %586 = vmatprep.subr.mxu0 0.0
        %587 = vmatpush2.msra.mxu0 0.0
        %588 = vmatprep.subr.mxu0 0.0
        %589 = vmatpush2.msra.mxu0 0.0
        %590 = vmatprep.subr.mxu0 0.0
        %591 = vmatpush2.msra.mxu0 0.0
        %592 = vmatprep.subr.mxu0 0.0
        %593 = vmatpush2.msra.mxu0 0.0
        %594 = vmatprep.subr.mxu0 0.0
        %595 = vmatpush2.msra.mxu0 0.0
        %596 = vmatprep.subr.mxu0 0.0
        %597 = vmatpush2.msra.mxu0 0.0
        %598 = vmatprep.subr.mxu0 0.0
        %599 = vmatpush2.msra.mxu0 0.0
        %600 = vmatprep.subr.mxu0 0.0
        %601 = vmatpush2.msra.mxu0 0.0
        %602 = vmatprep.subr.mxu0 0.0
        %603 = vmatpush2.msra.mxu0 0.0
        %604 = vmatprep.subr.mxu0 0.0
        %605 = vmatpush2.msra.mxu0 0.0
        %606 = vmatprep.subr.mxu0 0.0
        %607 = vmatpush2.msra.mxu0 0.0
        %608 = vmatprep.subr.mxu0 0.0
        %609 = vmatpush2.msra.mxu0 0.0
        %610 = vmatprep.subr.mxu0 0.0
        %611 = vmatpush2.msra.mxu0 0.0
        %612 = vmatprep.subr.mxu0 0.0
        %613 = vmatpush2.msra.mxu0 0.0
        %614 = vmatprep.subr.mxu0 0.0
        %615 = vmatpush2.msra.mxu0 0.0
        %616 = vmatprep.mubr.f32.mxu0 0.0
        %617 = vmatmul.mubr.f32.gmra.mxu0 %v550
        %v618 = vpop.f32.mrf.mxu0
        %v619 = vadd.f32 0.0, %v618
        %v620 = vpop.f32.mrf.mxu0
        %v621 = vadd.f32 0.0, %v620
        %622 = vdwg.mxu0
        %v623 = vadd.f32 %v543, %v619
        %v624 = vadd.f32 %v545, %v621
        %v625 = vld [vmem:[%s355] sm:$0xff]
        %v626 = vld [vmem:[%s5] sm:$0xff]
        %628 = vset.pattern.permute.xlu0 0
        %629 = vperm.xlu0 %628, %v626
        %v630 = vpop.permute.xlu0 %629
        %v632 = vadd.f32 %v623, %v630
        %v633 = vadd.f32 %v624, %v630
        %635 = vset.pattern.permute.xlu0 0
        %636 = vperm.xlu0 %635, %v625
        %v637 = vpop.permute.xlu0 %636
        %v639 = vmul.f32 %v637, %v373
        %v640 = vmul.f32 %v637, %v374
        %v641 = vadd.f32 %v632, %v639
        %v642 = vadd.f32 %v633, %v640
        %643 = vset.pattern.permute.xlu0 1
        %644 = vperm.xlu0 %643, %v625
        %v645 = vpop.permute.xlu0 %644
        %v647 = vmul.f32 %v645, %v379
        %v648 = vmul.f32 %v645, %v380
        %v649 = vadd.f32 %v641, %v647
        %v650 = vadd.f32 %v642, %v648
        %v651 = vmax.f32 %v649, 0.0
        %v652 = vmax.f32 %v650, 0.0
        %653 = vrot.lane.b32.xlu0 %v651, 1
        %v654 = vpop.permute.xlu0 %653
        %655 = vrot.lane.b32.xlu0 %v652, 1
        %v656 = vpop.permute.xlu0 %655
        %v657 = vsel %vm385, %v654, %v656
        %v658 = vsel %vm385, %v656, %v654
        %659 = vrot.lane.b32.xlu0 %v651, 127
        %v660 = vpop.permute.xlu0 %659
        %661 = vrot.lane.b32.xlu0 %v652, 127
        %v662 = vpop.permute.xlu0 %661
        %v663 = vsel %vm392, %v660, %v662
        %v664 = vsel %vm392, %v662, %v660
        %v665 = vld [vmem:[%s4] sm:$0xff]
        %s666 = scalar_lea.vmem %s4, 8
        %v667 = vld [vmem:[%s666] sm:$0xff]
        %v669 = vsel %vm398, %v667, 0
        %671 = vmatprep.subr.mxu0 0.0
        %672 = vmatpush1.msra.mxu0 0.0
        %673 = vmatprep.subr.mxu0 0.0
        %674 = vmatpush1.msra.mxu0 0.0
        %675 = vmatprep.subr.mxu0 0.0
        %676 = vmatpush1.msra.mxu0 0.0
        %677 = vmatprep.subr.mxu0 0.0
        %678 = vmatpush1.msra.mxu0 0.0
        %679 = vmatprep.subr.mxu0 0.0
        %680 = vmatpush1.msra.mxu0 0.0
        %681 = vmatprep.subr.mxu0 0.0
        %682 = vmatpush1.msra.mxu0 0.0
        %683 = vmatprep.subr.mxu0 0.0
        %684 = vmatpush1.msra.mxu0 0.0
        %685 = vmatprep.subr.mxu0 0.0
        %686 = vmatpush1.msra.mxu0 0.0
        %687 = vmatprep.subr.mxu0 0.0
        %688 = vmatpush1.msra.mxu0 0.0
        %689 = vmatprep.subr.mxu0 0.0
        %690 = vmatpush1.msra.mxu0 0.0
        %691 = vmatprep.subr.mxu0 0.0
        %692 = vmatpush1.msra.mxu0 0.0
        %693 = vmatprep.subr.mxu0 0.0
        %694 = vmatpush1.msra.mxu0 0.0
        %695 = vmatprep.subr.mxu0 0.0
        %696 = vmatpush1.msra.mxu0 0.0
        %697 = vmatprep.subr.mxu0 0.0
        %698 = vmatpush1.msra.mxu0 0.0
        %699 = vmatprep.subr.mxu0 0.0
        %700 = vmatpush1.msra.mxu0 0.0
        %701 = vmatprep.subr.mxu0 %v652
        %702 = vmatpush1.msra.mxu0 %v651
        %703 = vmatprep.subr.mxu0 0.0
        %704 = vmatpush2.msra.mxu0 0.0
        %705 = vmatprep.subr.mxu0 0.0
        %706 = vmatpush2.msra.mxu0 0.0
        %707 = vmatprep.subr.mxu0 0.0
        %708 = vmatpush2.msra.mxu0 0.0
        %709 = vmatprep.subr.mxu0 0.0
        %710 = vmatpush2.msra.mxu0 0.0
        %711 = vmatprep.subr.mxu0 0.0
        %712 = vmatpush2.msra.mxu0 0.0
        %713 = vmatprep.subr.mxu0 0.0
        %714 = vmatpush2.msra.mxu0 0.0
        %715 = vmatprep.subr.mxu0 0.0
        %716 = vmatpush2.msra.mxu0 0.0
        %717 = vmatprep.subr.mxu0 0.0
        %718 = vmatpush2.msra.mxu0 0.0
        %719 = vmatprep.subr.mxu0 0.0
        %720 = vmatpush2.msra.mxu0 0.0
        %721 = vmatprep.subr.mxu0 0.0
        %722 = vmatpush2.msra.mxu0 0.0
        %723 = vmatprep.subr.mxu0 0.0
        %724 = vmatpush2.msra.mxu0 0.0
        %725 = vmatprep.subr.mxu0 0.0
        %726 = vmatpush2.msra.mxu0 0.0
        %727 = vmatprep.subr.mxu0 0.0
        %728 = vmatpush2.msra.mxu0 0.0
        %729 = vmatprep.subr.mxu0 0.0
        %730 = vmatpush2.msra.mxu0 0.0
        %731 = vmatprep.subr.mxu0 0.0
        %732 = vmatpush2.msra.mxu0 0.0
        %733 = vmatprep.subr.mxu0 0.0
        %734 = vmatpush2.msra.mxu0 0.0
        %735 = vmatprep.mubr.f32.mxu0 0.0
        %736 = vmatmul.mubr.f32.gmra.mxu0 %v669
        %v737 = vpop.f32.mrf.mxu0
        %v738 = vadd.f32 0.0, %v737
        %v739 = vpop.f32.mrf.mxu0
        %v740 = vadd.f32 0.0, %v739
        %741 = vdwg.mxu0
        %v743 = vsel %vm398, %v665, 0
        %745 = vmatprep.subr.mxu0 0.0
        %746 = vmatpush1.msra.mxu0 0.0
        %747 = vmatprep.subr.mxu0 0.0
        %748 = vmatpush1.msra.mxu0 0.0
        %749 = vmatprep.subr.mxu0 0.0
        %750 = vmatpush1.msra.mxu0 0.0
        %751 = vmatprep.subr.mxu0 0.0
        %752 = vmatpush1.msra.mxu0 0.0
        %753 = vmatprep.subr.mxu0 0.0
        %754 = vmatpush1.msra.mxu0 0.0
        %755 = vmatprep.subr.mxu0 0.0
        %756 = vmatpush1.msra.mxu0 0.0
        %757 = vmatprep.subr.mxu0 0.0
        %758 = vmatpush1.msra.mxu0 0.0
        %759 = vmatprep.subr.mxu0 0.0
        %760 = vmatpush1.msra.mxu0 0.0
        %761 = vmatprep.subr.mxu0 0.0
        %762 = vmatpush1.msra.mxu0 0.0
        %763 = vmatprep.subr.mxu0 0.0
        %764 = vmatpush1.msra.mxu0 0.0
        %765 = vmatprep.subr.mxu0 0.0
        %766 = vmatpush1.msra.mxu0 0.0
        %767 = vmatprep.subr.mxu0 0.0
        %768 = vmatpush1.msra.mxu0 0.0
        %769 = vmatprep.subr.mxu0 0.0
        %770 = vmatpush1.msra.mxu0 0.0
        %771 = vmatprep.subr.mxu0 0.0
        %772 = vmatpush1.msra.mxu0 0.0
        %773 = vmatprep.subr.mxu0 0.0
        %774 = vmatpush1.msra.mxu0 0.0
        %775 = vmatprep.subr.mxu0 %v657
        %776 = vmatpush1.msra.mxu0 %v658
        %777 = vmatprep.subr.mxu0 0.0
        %778 = vmatpush2.msra.mxu0 0.0
        %779 = vmatprep.subr.mxu0 0.0
        %780 = vmatpush2.msra.mxu0 0.0
        %781 = vmatprep.subr.mxu0 0.0
        %782 = vmatpush2.msra.mxu0 0.0
        %783 = vmatprep.subr.mxu0 0.0
        %784 = vmatpush2.msra.mxu0 0.0
        %785 = vmatprep.subr.mxu0 0.0
        %786 = vmatpush2.msra.mxu0 0.0
        %787 = vmatprep.subr.mxu0 0.0
        %788 = vmatpush2.msra.mxu0 0.0
        %789 = vmatprep.subr.mxu0 0.0
        %790 = vmatpush2.msra.mxu0 0.0
        %791 = vmatprep.subr.mxu0 0.0
        %792 = vmatpush2.msra.mxu0 0.0
        %793 = vmatprep.subr.mxu0 0.0
        %794 = vmatpush2.msra.mxu0 0.0
        %795 = vmatprep.subr.mxu0 0.0
        %796 = vmatpush2.msra.mxu0 0.0
        %797 = vmatprep.subr.mxu0 0.0
        %798 = vmatpush2.msra.mxu0 0.0
        %799 = vmatprep.subr.mxu0 0.0
        %800 = vmatpush2.msra.mxu0 0.0
        %801 = vmatprep.subr.mxu0 0.0
        %802 = vmatpush2.msra.mxu0 0.0
        %803 = vmatprep.subr.mxu0 0.0
        %804 = vmatpush2.msra.mxu0 0.0
        %805 = vmatprep.subr.mxu0 0.0
        %806 = vmatpush2.msra.mxu0 0.0
        %807 = vmatprep.subr.mxu0 0.0
        %808 = vmatpush2.msra.mxu0 0.0
        %809 = vmatprep.mubr.f32.mxu0 0.0
        %810 = vmatmul.mubr.f32.gmra.mxu0 %v743
        %v811 = vpop.f32.mrf.mxu0
        %v812 = vadd.f32 %v738, %v811
        %v813 = vpop.f32.mrf.mxu0
        %v814 = vadd.f32 %v740, %v813
        %815 = vdwg.mxu0
        %s816 = scalar_lea.vmem %s4, 16
        %v817 = vld [vmem:[%s816] sm:$0xff]
        %v819 = vsel %vm398, %v817, 0
        %821 = vmatprep.subr.mxu0 0.0
        %822 = vmatpush1.msra.mxu0 0.0
        %823 = vmatprep.subr.mxu0 0.0
        %824 = vmatpush1.msra.mxu0 0.0
        %825 = vmatprep.subr.mxu0 0.0
        %826 = vmatpush1.msra.mxu0 0.0
        %827 = vmatprep.subr.mxu0 0.0
        %828 = vmatpush1.msra.mxu0 0.0
        %829 = vmatprep.subr.mxu0 0.0
        %830 = vmatpush1.msra.mxu0 0.0
        %831 = vmatprep.subr.mxu0 0.0
        %832 = vmatpush1.msra.mxu0 0.0
        %833 = vmatprep.subr.mxu0 0.0
        %834 = vmatpush1.msra.mxu0 0.0
        %835 = vmatprep.subr.mxu0 0.0
        %836 = vmatpush1.msra.mxu0 0.0
        %837 = vmatprep.subr.mxu0 0.0
        %838 = vmatpush1.msra.mxu0 0.0
        %839 = vmatprep.subr.mxu0 0.0
        %840 = vmatpush1.msra.mxu0 0.0
        %841 = vmatprep.subr.mxu0 0.0
        %842 = vmatpush1.msra.mxu0 0.0
        %843 = vmatprep.subr.mxu0 0.0
        %844 = vmatpush1.msra.mxu0 0.0
        %845 = vmatprep.subr.mxu0 0.0
        %846 = vmatpush1.msra.mxu0 0.0
        %847 = vmatprep.subr.mxu0 0.0
        %848 = vmatpush1.msra.mxu0 0.0
        %849 = vmatprep.subr.mxu0 0.0
        %850 = vmatpush1.msra.mxu0 0.0
        %851 = vmatprep.subr.mxu0 %v664
        %852 = vmatpush1.msra.mxu0 %v663
        %853 = vmatprep.subr.mxu0 0.0
        %854 = vmatpush2.msra.mxu0 0.0
        %855 = vmatprep.subr.mxu0 0.0
        %856 = vmatpush2.msra.mxu0 0.0
        %857 = vmatprep.subr.mxu0 0.0
        %858 = vmatpush2.msra.mxu0 0.0
        %859 = vmatprep.subr.mxu0 0.0
        %860 = vmatpush2.msra.mxu0 0.0
        %861 = vmatprep.subr.mxu0 0.0
        %862 = vmatpush2.msra.mxu0 0.0
        %863 = vmatprep.subr.mxu0 0.0
        %864 = vmatpush2.msra.mxu0 0.0
        %865 = vmatprep.subr.mxu0 0.0
        %866 = vmatpush2.msra.mxu0 0.0
        %867 = vmatprep.subr.mxu0 0.0
        %868 = vmatpush2.msra.mxu0 0.0
        %869 = vmatprep.subr.mxu0 0.0
        %870 = vmatpush2.msra.mxu0 0.0
        %871 = vmatprep.subr.mxu0 0.0
        %872 = vmatpush2.msra.mxu0 0.0
        %873 = vmatprep.subr.mxu0 0.0
        %874 = vmatpush2.msra.mxu0 0.0
        %875 = vmatprep.subr.mxu0 0.0
        %876 = vmatpush2.msra.mxu0 0.0
        %877 = vmatprep.subr.mxu0 0.0
        %878 = vmatpush2.msra.mxu0 0.0
        %879 = vmatprep.subr.mxu0 0.0
        %880 = vmatpush2.msra.mxu0 0.0
        %881 = vmatprep.subr.mxu0 0.0
        %882 = vmatpush2.msra.mxu0 0.0
        %883 = vmatprep.subr.mxu0 0.0
        %884 = vmatpush2.msra.mxu0 0.0
        %885 = vmatprep.mubr.f32.mxu0 0.0
        %886 = vmatmul.mubr.f32.gmra.mxu0 %v819
        %v887 = vpop.f32.mrf.mxu0
        %v888 = vadd.f32 0.0, %v887
        %v889 = vpop.f32.mrf.mxu0
        %v890 = vadd.f32 0.0, %v889
        %891 = vdwg.mxu0
        %v892 = vadd.f32 %v812, %v888
        %v893 = vadd.f32 %v814, %v890
        %v894 = vld [vmem:[%s362] sm:$0xff]
        %v895 = vld [vmem:[%s6] sm:$0xff]
        %897 = vset.pattern.permute.xlu0 0
        %898 = vperm.xlu0 %897, %v895
        %v899 = vpop.permute.xlu0 %898
        %v901 = vadd.f32 %v892, %v899
        %v902 = vadd.f32 %v893, %v899
        %904 = vset.pattern.permute.xlu0 0
        %905 = vperm.xlu0 %904, %v894
        %v906 = vpop.permute.xlu0 %905
        %v908 = vmul.f32 %v906, %v373
        %v909 = vmul.f32 %v906, %v374
        %v910 = vadd.f32 %v901, %v908
        %v911 = vadd.f32 %v902, %v909
        %912 = vset.pattern.permute.xlu0 1
        %913 = vperm.xlu0 %912, %v894
        %v914 = vpop.permute.xlu0 %913
        %v916 = vmul.f32 %v914, %v379
        %v917 = vmul.f32 %v914, %v380
        %v918 = vadd.f32 %v910, %v916
        %v919 = vadd.f32 %v911, %v917
        %v920 = vadd.f32 %v918, %v364
        %v921 = vadd.f32 %v919, %v365
        %v922 = vmax.f32 %v920, 0.0
        %v923 = vmax.f32 %v921, 0.0
        %924 = vst [vmem:[%s338] sm:$0xff] %v922
        %925 = vst [vmem:[%s338 + $0x8] sm:$0xff] %v923
        %s926 = sand.u32 %s211, 1
        %s927 = scalar_lea.sflag [#allocation3], %s926
        %s928 = sand.u32 %s211, 1
        %s929 = smul.addr %s928, 16
        %s930 = scalar_lea.vmem [#allocation2], %s929
        // Predicated region
        $region49: #{basic_block_pallas.1} parent=47 // pred_check
          %p931 = pneg %p221
        $region50: #{basic_block_pallas.1} parent=47 // pred_check_branch
          %933 = sbr.rel (%p931) target = $region52
        $region51: #{basic_block_pallas.1} parent=47 // pred_region
          %s934 = smul.u32 2, %s26
          %s936 = ssub.s32 256, 256
          %937 = vsyncadd %s927, %s936
          %s938 = smul.addr %s25, 2
          %s939 = sadd.s32 %s934, %s938
          %s940 = smul.addr %s939, 128
          %s941 = scalar_lea.hbm %s7, %s940
          %s943 = sshll.u32 %s930, 4
          %s944 = int_to_ptr.vmem [resolvable:$true] %s943
          %946 = dma.vmem_to_hbm [thread:$0]  %s944, 256, %s941, %s927
        $region52: #{basic_block_pallas.1} parent=47 // pred_fallthru
          _
      $region48: #{basic_block_pallas.1} parent=5 // pred_fallthru
        _
      %p947 = scmp.le.s32.totalorder 2, %s16
      // Predicated region
      $region53: #{basic_block_pallas.1} parent=5 // pred_check
        %p948 = pneg %p947
      $region54: #{basic_block_pallas.1} parent=5 // pred_check_branch
        %950 = sbr.rel (%p948) target = $region56
      $region55: #{basic_block_pallas.1} parent=5 // pred_region
        %s951 = ssub.s32 %s16, 2
        // Predicated region
        $region57: #{basic_block_pallas.1} parent=55 // pred_check
          %p952 = pneg %p227
        $region58: #{basic_block_pallas.1} parent=55 // pred_check_branch
          %954 = sbr.rel (%p952) target = $region60
        $region59: #{basic_block_pallas.1} parent=55 // pred_region
          %s955 = sand.u32 %s212, 1
          %s956 = scalar_lea.sflag [#allocation3], %s955
          %s957 = sand.u32 %s212, 1
          %s958 = smul.addr %s957, 16
          %s959 = scalar_lea.vmem [#allocation2], %s958
          %960 = dma.done %s956, 256
        $region60: #{basic_block_pallas.1} parent=55 // pred_fallthru
          _
      $region56: #{basic_block_pallas.1} parent=5 // pred_fallthru
        _
    $region6: #{basic_block_pallas.1} parent=1 // loop_footer
      %s20 = sadd.s32 1, %s16
    $region7: #{basic_block_pallas.1} parent=1 // loop_footer_branch
      %15 = sbr.rel target = $region3
    $region8: #{basic_block_pallas.1} parent=1 // loop_exit
      _
    %961 = vsyncpa [#allocation3], 1
    %s962 = scalar_lea.sflag [#allocation3], 1
    %963 = vsyncpa %s962, 1

</llo_original>
